<compile_context>
chip_gen: v7x
topology: tpu7x:2x2x1
jax: 0.10.0
libtpu: 0.0.40
codegen_flags: <defaults>
</compile_context>

<pallas_src>
import jax
import jax.numpy as jnp
from jax.experimental import pallas as pl
from jax.experimental.pallas import tpu as pltpu


_LANE_CANDIDATES = (4096, 2048, 1024, 512, 256, 128)
_DEFAULT_BLOCK_BYTES = 2 * 1024 * 1024      # v5e/v6e: ~85% of HBM roofline measured
_V7X_BLOCK_BYTES = 8 * 1024 * 1024          # v7x: amortize per-grid-step overhead
_V7X_VMEM_LIMIT = 48 * 1024 * 1024          # 8 MiB x (in+out) x 2 buffers = 32 MiB + slack
_SINGLE_BLOCK_MAX_BYTES = 1 * 1024 * 1024   # slabs <= this may run as one block
_RAGGED_BLOCK_BYTES = 256 * 1024            # conservative 1D block (rare fallback path)


def _h_swish_kernel(x_ref, o_ref):
    # relu6(x + 3) / 6 * x — pure VPU elementwise; HBM is the binding resource.
    x = x_ref[...].astype(jnp.float32)
    o_ref[...] = ((jnp.clip(x + 3.0, 0.0, 6.0) / 6.0) * x).astype(o_ref.dtype)


def _tiling_for_this_tpu():
    """Return (block_bytes, vmem_limit_bytes) chosen per TPU generation."""
    try:
        vmem_bytes = int(pltpu.get_tpu_info().vmem_capacity_bytes)
    except Exception:
        return _DEFAULT_BLOCK_BYTES, None     # interpret mode / unknown: safe defaults
    if vmem_bytes <= 64 * 1024 * 1024:
        # v7x-class: small VMEM but very high HBM BW -> bigger blocks, explicit limit.
        return _V7X_BLOCK_BYTES, _V7X_VMEM_LIMIT
    # v5e / v6e-class (128 MiB VMEM): 2 MiB blocks already sit near the roofline.
    return _DEFAULT_BLOCK_BYTES, None


def _compiler_params(vmem_limit):
    return pltpu.CompilerParams(
        dimension_semantics=("parallel",),    # lets v7x shard grid steps over its 2 TCs
        allow_input_fusion=[True],            # XLA may fuse an elementwise producer
        vmem_limit_bytes=vmem_limit,
    )


def _h_swish_2d(x2d, *, donate_input, block_bytes, vmem_limit):
    rows, lanes = x2d.shape
    dtype = x2d.dtype
    itemsize = jnp.dtype(dtype).itemsize
    pack = max(8, 32 // max(1, itemsize))     # sublane packing: 8 f32 / 16 bf16 / 32 int8
    slab_bytes = rows * lanes * itemsize

    if slab_bytes <= _SINGLE_BLOCK_MAX_BYTES or rows <= pack:
        tr = rows                             # tiny slab: single full-extent block
    else:
        # At least 2 blocks (even count preferred) so megacore sharding and DMA/compute
        # overlap stay alive even when the whole slab would fit in one target block.
        nblk = max(2, pl.cdiv(slab_bytes, block_bytes))
        if nblk % 2:
            nblk += 1
        tr = pl.cdiv(pl.cdiv(rows, nblk), pack) * pack
        if tr >= rows:                        # safety: keep the block spec legal
            tr = rows

    grid = (pl.cdiv(rows, tr),)               # cdiv grid: Pallas masks the tail block

    return pl.pallas_call(
        _h_swish_kernel,
        out_shape=jax.ShapeDtypeStruct((rows, lanes), dtype),
        grid_spec=pltpu.PrefetchScalarGridSpec(
            num_scalar_prefetch=0,
            grid=grid,
            in_specs=[pl.BlockSpec((tr, lanes), lambda i: (i, 0))],
            out_specs=pl.BlockSpec((tr, lanes), lambda i: (i, 0)),
        ),
        compiler_params=_compiler_params(vmem_limit),
        input_output_aliases=({0: 0} if donate_input else {}),
    )(x2d)


def _h_swish_1d(x_flat, *, donate_input, vmem_limit):
    # Ragged fallback (element count not divisible by 128): run directly on the flat
    # array. No jnp.pad / output slice -> no extra HBM round trips. The partial tail
    # block of the cdiv grid is masked by Pallas.
    (n,) = x_flat.shape
    dtype = x_flat.dtype
    itemsize = jnp.dtype(dtype).itemsize
    tile_elems = 128 * max(8, 32 // max(1, itemsize))   # one packed (sublane, lane) tile
    blk = max(tile_elems, (_RAGGED_BLOCK_BYTES // itemsize) // tile_elems * tile_elems)
    if n <= blk:
        blk = n                               # full-extent block: no (8,128) constraint
    grid = (pl.cdiv(n, blk),)

    return pl.pallas_call(
        _h_swish_kernel,
        out_shape=jax.ShapeDtypeStruct((n,), dtype),
        grid_spec=pltpu.PrefetchScalarGridSpec(
            num_scalar_prefetch=0,
            grid=grid,
            in_specs=[pl.BlockSpec((blk,), lambda i: (i,))],
            out_specs=pl.BlockSpec((blk,), lambda i: (i,)),
        ),
        compiler_params=_compiler_params(vmem_limit),
        input_output_aliases=({0: 0} if donate_input else {}),
    )(x_flat)


def h_swish(x: jax.Array, *, donate_input: bool = False) -> jax.Array:
    """Elementwise h-swish (MobileNetV3). Any shape; shape & dtype preserved.

    donate_input=True adds input_output_aliases={0: 0} so the output reuses the input
    buffer (halves HBM footprint) — use only when the caller no longer needs x.
    """
    orig_shape = x.shape
    n = x.size
    if n == 0:
        return x

    block_bytes, vmem_limit = _tiling_for_this_tpu()

    lanes = None
    for cand in _LANE_CANDIDATES:
        if n % cand == 0:
            lanes = cand
            break

    if lanes is not None:
        out = _h_swish_2d(jnp.reshape(x, (n // lanes, lanes)),
                          donate_input=donate_input,
                          block_bytes=block_bytes, vmem_limit=vmem_limit)
    else:
        out = _h_swish_1d(jnp.reshape(x, (n,)),
                          donate_input=donate_input, vmem_limit=vmem_limit)
    return jnp.reshape(out, orig_shape)


def h_swish_ref(x):
    xf = x.astype(jnp.float32)
    return (jnp.clip(xf + 3.0, 0.0, 6.0) / 6.0 * xf).astype(x.dtype)


if __name__ == "__main__":
    key = jax.random.PRNGKey(0)
    k1, k2, k3, k4 = jax.random.split(key, 4)

    # 1) Module-consistent NCHW shape: batch=2, channels=4, spatial=16x16 (f32).
    x1 = jax.random.normal(k1, (2, 4, 16, 16), dtype=jnp.float32) * 4.0
    o1 = jax.block_until_ready(h_swish(x1))
    assert o1.shape == x1.shape and o1.dtype == x1.dtype
    assert jnp.allclose(o1, h_swish_ref(x1), atol=1e-6, rtol=1e-6), "mismatch (main)"

    # 2) Ragged element count -> 1D no-pad fallback path.
    x2 = jax.random.normal(k2, (2, 3, 7, 5), dtype=jnp.float32) * 4.0
    o2 = jax.block_until_ready(h_swish(x2))
    assert o2.shape == x2.shape and o2.dtype == x2.dtype
    assert jnp.allclose(o2, h_swish_ref(x2), atol=1e-6, rtol=1e-6), "mismatch (ragged)"

    # 3) Multi-block path (>1 MiB slab -> even grid >= 2) with donated input.
    x3 = jax.random.normal(k3, (8, 64, 32, 32), dtype=jnp.float32) * 4.0
    ref3 = h_swish_ref(x3)                    # compute reference before donating x3
    o3 = jax.block_until_ready(h_swish(x3, donate_input=True))
    assert o3.shape == x3.shape and o3.dtype == x3.dtype
    assert jnp.allclose(o3, ref3, atol=1e-6, rtol=1e-6), "mismatch (donated)"

    # 4) bf16 activations: multi-block path, sublane pack = 16, f32 compute in-kernel.
    x4 = (jax.random.normal(k4, (16, 64, 32, 32), dtype=jnp.float32) * 4.0).astype(jnp.bfloat16)
    o4 = jax.block_until_ready(h_swish(x4))
    assert o4.shape == x4.shape and o4.dtype == x4.dtype
    assert jnp.allclose(o4.astype(jnp.float32), h_swish_ref(x4).astype(jnp.float32),
                        atol=2e-2, rtol=2e-2), "mismatch (bf16)"

    print("KERNEL_OK")
</pallas_src>

<mosaic_0001>
module attributes {stable_mosaic.version = 11 : i64} {
  func.func @_h_swish_kernel(%arg0: i32, %arg1: memref<1x2048xf32, #tpu.memory_space<vmem>>, %arg2: memref<1x2048xf32, #tpu.memory_space<vmem>>) attributes {dimension_semantics = [#tpu.dimension_semantics<parallel>], iteration_bounds = array<i64: 1>, scalar_prefetch = 0 : i64, scratch_operands = 0 : i64, tpu.core_type = #tpu.core_type<tc>, window_params = [{transform_indices = @transform_0, window_bounds = array<i64: 1, 2048>}, {transform_indices = @transform_1, window_bounds = array<i64: 1, 2048>}]} {
    %c0 = arith.constant 0 : index
    %c0_0 = arith.constant 0 : index
    %0 = vector.load %arg1[%c0, %c0_0] : memref<1x2048xf32, #tpu.memory_space<vmem>>, vector<1x2048xf32>
    %cst = arith.constant 3.000000e+00 : f32
    %1 = vector.broadcast %cst : f32 to vector<1x2048xf32>
    %2 = arith.addf %0, %1 : vector<1x2048xf32>
    %cst_1 = arith.constant 0.000000e+00 : f32
    %cst_2 = arith.constant 6.000000e+00 : f32
    %3 = vector.broadcast %cst_1 : f32 to vector<1x2048xf32>
    %4 = arith.maximumf %3, %2 : vector<1x2048xf32>
    %5 = vector.broadcast %cst_2 : f32 to vector<1x2048xf32>
    %6 = arith.minimumf %5, %4 : vector<1x2048xf32>
    %cst_3 = arith.constant 6.000000e+00 : f32
    %7 = vector.broadcast %cst_3 : f32 to vector<1x2048xf32>
    %8 = arith.divf %6, %7 : vector<1x2048xf32>
    %9 = arith.mulf %8, %0 : vector<1x2048xf32>
    %c0_4 = arith.constant 0 : index
    %c0_5 = arith.constant 0 : index
    %10 = vector.load %arg2[%c0_4, %c0_5] : memref<1x2048xf32, #tpu.memory_space<vmem>>, vector<1x2048xf32>
    tpu.vector_store %arg2[%c0_4, %c0_5], %9 {strides = array<i32>} : memref<1x2048xf32, #tpu.memory_space<vmem>>, vector<1x2048xf32>,
    return
  }
  func.func @transform_0(%arg0: i32) -> (i32, i32) {
    %c0_i32 = arith.constant 0 : i32
    %c0_i32_0 = arith.constant 0 : i32
    return %arg0, %c0_i32 : i32, i32
  }
  func.func @transform_1(%arg0: i32) -> (i32, i32) {
    %c0_i32 = arith.constant 0 : i32
    %c0_i32_0 = arith.constant 0 : i32
    return %arg0, %c0_i32 : i32, i32
  }
}

</mosaic_0001>

<llo_original>
// kernel: tpu_custom_call.1
$region0: #{tpu_custom_call.1}
  #allocation0 [shape = 'u32[]', space=smem, size = 0x4, offset = 0x4, fixed_abs, tag = 'smem constant byte address 0x4 - core index']
  #allocation1 [shape = 'u32[144,128]{1,0:T(1,128)}', space=vmem, size = 0x12000, scoped, tag = 'internal scratch']
  %s0 = inlined_call_operand.hbm [shape: f32[1,2048], index: 0, kind: input, shape index: {}]
  %s1 = inlined_call_operand.hbm [shape: f32[1,2048], index: 1, kind: output, shape index: {}]
  %s2 = sld [smem:[#allocation0]]
  $region18: #{tpu_custom_call.1} parent=0
    _
  %s4 = ssub.s32 1, %s2
  %s5 = scalar_select 0, %s4, %s2
  $region1: #{tpu_custom_call.1} parent=0
    #allocation2 [shape = 'u8[8192]{0}', space=vmem, size = 0x2000, scoped, tag = 'input window, operand 0, single buffered']
    #allocation3 [shape = 's32[1]{0}', space=sflag, size = 0x4, scoped, tag = 'scoped memory for tpu_custom_call.1']
    #allocation4 [shape = 's32[1]{0}', space=sflag, size = 0x4, scoped, tag = 'scoped memory for tpu_custom_call.1']
    #allocation5 [shape = 'u8[8192]{0}', space=vmem, size = 0x2000, scoped, tag = 'output window, operand 0, single buffered']
    %6 = vsyncpa [#allocation3], 0
    %7 = vsyncpa [#allocation4], 0
    // Predicated region
    $region2: #{tpu_custom_call.1} parent=1 // pred_check
      _
    $region3: #{tpu_custom_call.1} parent=1 // pred_check_branch
      %9 = sbr.rel (0) target = $region5
    $region4: #{tpu_custom_call.1} parent=1 // pred_region
      %s11 = ssub.s32 256, 256
      %12 = vsyncadd [#allocation3], %s11
      %s14 = sshll.u32 [#allocation2], 4
      %s15 = int_to_ptr.vmem [resolvable:$true] %s14
      %17 = dma.hbm_to_vmem [thread:$0]  %s0, 256, %s15, [#allocation3]
    $region5: #{tpu_custom_call.1} parent=1 // pred_fallthru
      _
    // Predicated region
    $region6: #{tpu_custom_call.1} parent=1 // pred_check
      _
    $region7: #{tpu_custom_call.1} parent=1 // pred_check_branch
      %19 = sbr.rel (0) target = $region9
    $region8: #{tpu_custom_call.1} parent=1 // pred_region
      %20 = dma.done [#allocation3], 256
    $region9: #{tpu_custom_call.1} parent=1 // pred_fallthru
      _
    %v21 = vld [vmem:[#allocation2] sm:$0xff]
    %v22 = vld [vmem:[#allocation2 + $0x8] sm:$0xff]
    %v23 = vadd.f32 %v21, 3.0
    %v24 = vadd.f32 %v22, 3.0
    %v25 = vmax.f32 %v23, 0.0
    %v26 = vmax.f32 %v24, 0.0
    %v27 = vmin.f32 %v25, 6.0
    %v28 = vmin.f32 %v26, 6.0
    %v29 = vrcp.pop 6.0
    %v30 = vmul.f32 %v27, %v29
    %v31 = vmul.f32 %v28, %v29
    %v32 = vmul.f32 %v30, %v21
    %v33 = vmul.f32 %v31, %v22
    %34 = vst [vmem:[#allocation5] sm:$0xff] %v32
    %35 = vst [vmem:[#allocation5 + $0x8] sm:$0xff] %v33
    // Predicated region
    $region10: #{tpu_custom_call.1} parent=1 // pred_check
      _
    $region11: #{tpu_custom_call.1} parent=1 // pred_check_branch
      %37 = sbr.rel (0) target = $region13
    $region12: #{tpu_custom_call.1} parent=1 // pred_region
      %s39 = ssub.s32 256, 256
      %40 = vsyncadd [#allocation4], %s39
      %s42 = sshll.u32 [#allocation5], 4
      %s43 = int_to_ptr.vmem [resolvable:$true] %s42
      %45 = dma.vmem_to_hbm [thread:$0]  %s43, 256, %s1, [#allocation4]
    $region13: #{tpu_custom_call.1} parent=1 // pred_fallthru
      _
    // Predicated region
    $region14: #{tpu_custom_call.1} parent=1 // pred_check
      _
    $region15: #{tpu_custom_call.1} parent=1 // pred_check_branch
      %47 = sbr.rel (0) target = $region17
    $region16: #{tpu_custom_call.1} parent=1 // pred_region
      %48 = dma.done [#allocation4], 256
    $region17: #{tpu_custom_call.1} parent=1 // pred_fallthru
      _
    %49 = vsyncpa [#allocation3], 1
    %50 = vsyncpa [#allocation4], 1

</llo_original>
